<compile_context>
chip_gen: v7x
topology: tpu7x:2x2x1
jax: 0.10.0
libtpu: 0.0.40
codegen_flags: <defaults>
</compile_context>

<pallas_src>
import functools

import jax
import jax.numpy as jnp
from jax.experimental import pallas as pl
from jax.experimental.pallas import tpu as pltpu

OUT_DIM = 5
_SMALL_N_FASTPATH = 512   # below this, XLA's fused GEMV beats a custom call


def _linear_kernel(x_ref, w_ref, b_ref, o_ref):
    # x_ref: (TM, D), w_ref: (D, 5), b_ref: (1, 5), o_ref: (TM, 5)
    acc = jnp.dot(x_ref[...], w_ref[...], preferred_element_type=jnp.float32)
    o_ref[...] = (acc + b_ref[...].astype(jnp.float32)).astype(o_ref.dtype)


def prepare_params(weight, bias, compute_dtype=None):
    """Hoist layout glue out of the per-call path.

    weight: (5, D) PyTorch layout -> (D, 5); bias: (5,) -> (1, 5).
    If compute_dtype is given (e.g. jnp.bfloat16), the weight is cast so a
    bf16 x produces a homogeneous bf16 MXU dot (f32 accumulate preserved).
    Call once, outside the hot loop."""
    w_t = weight.T
    if compute_dtype is not None:
        w_t = w_t.astype(compute_dtype)
    return w_t, bias.reshape(1, -1)


def _round_up(v, m):
    return -(-v // m) * m


@functools.lru_cache(maxsize=1)
def _chip_budget():
    """Returns (x_tile_target_bytes, split_for_2tc, vmem_ceiling_bytes)."""
    try:
        vmem_phys = int(pltpu.get_tpu_info().vmem_capacity_bytes)
    except Exception:
        vmem_phys = 128 << 20  # assume v5e/v6e-class if query unavailable
    if vmem_phys <= (64 << 20):
        # v7x-like: 64 MiB VMEM/TC, 2 TCs, ~3.2 TB/s HBM.  Bigger tiles
        # (per-step overhead is relatively pricier), but cap total pipeline
        # footprint well under 48 MiB, and shard the batch across both TCs.
        return (8 << 20), True, (48 << 20)
    # v5e/v6e: 128 MiB VMEM, 1 TC.  6 MiB x tiles keep the double buffer
    # (12 MiB) under v5e's 16 MiB scoped default even before raising it.
    return (6 << 20), False, (100 << 20)


def _choose_tm(N, D, itemsize):
    """Bytes-sized row tile (not row-capped): big enough to amortize the
    ~0.35 us/step overhead, small enough for VMEM; on v7x-like chips, split
    large batches into >=4 'parallel' steps so both TensorCores pipeline."""
    target_bytes, split_for_2tc, _ = _chip_budget()
    row_bytes = max(1, D * itemsize)
    n_rounded = _round_up(max(N, 1), 8)
    tm = max(8, (target_bytes // row_bytes) // 8 * 8)
    tm = min(tm, n_rounded)
    if split_for_2tc and n_rounded >= 1024:
        tm_4steps = _round_up(pl.cdiv(n_rounded, 4), 8)
        tm = min(tm, max(8, tm_4steps))
    return tm


def clase_clasificacion_forward(x, w_t, b2, *, tm=None, force_pallas=False):
    """x: (N, D) f32/bf16; w_t: (D, 5) (pre-transposed); b2: (1, 5)."""
    N, D = x.shape
    out_dim = w_t.shape[1]

    # Small-batch fast path: pallas_call launch overhead dominates here.
    if N < _SMALL_N_FASTPATH and not force_pallas:
        acc = jnp.dot(x, w_t, preferred_element_type=jnp.float32)
        return (acc + b2.astype(jnp.float32)).astype(x.dtype)

    itemsize = jnp.dtype(x.dtype).itemsize
    if tm is None:
        tm = _choose_tm(N, D, itemsize)
    tm = max(8, min(tm, _round_up(N, 8)))

    _, _, vmem_ceiling = _chip_budget()
    w_bytes = int(w_t.size) * jnp.dtype(w_t.dtype).itemsize
    b_bytes = int(b2.size) * jnp.dtype(b2.dtype).itemsize
    x_tile_bytes = tm * D * itemsize
    out_tile_bytes = tm * out_dim * itemsize
    # double-buffered x + out tiles, resident weight/bias, + Mosaic scratch margin
    footprint = 2 * (x_tile_bytes + out_tile_bytes) + w_bytes + b_bytes
    vmem_limit = int(min(vmem_ceiling, max(32 << 20, footprint + (8 << 20))))

    grid = (pl.cdiv(N, tm),)
    cost = pl.CostEstimate(
        flops=2 * N * D * out_dim,
        transcendentals=0,
        bytes_accessed=(N * D * itemsize          # x reads (dominant)
                        + w_bytes + b_bytes       # weight + bias (actual dtypes)
                        + N * out_dim * itemsize),  # output writes
    )

    # TODO(synk): for very large D (>=512 f32) a lane-dense (tm, 128) padded
    # output + wrapper slice would remove masked vst.msk stores; not worth the
    # 25x write inflation at the small D this module is used with.
    return pl.pallas_call(
        _linear_kernel,
        out_shape=jax.ShapeDtypeStruct((N, out_dim), x.dtype),
        grid_spec=pltpu.PrefetchScalarGridSpec(
            num_scalar_prefetch=0,
            grid=grid,
            in_specs=[
                pl.BlockSpec((tm, D), lambda i: (i, 0)),        # x row tile
                pl.BlockSpec((D, out_dim), lambda i: (0, 0)),   # weight (VMEM-resident)
                pl.BlockSpec((1, out_dim), lambda i: (0, 0)),   # bias   (VMEM-resident)
            ],
            out_specs=pl.BlockSpec((tm, out_dim), lambda i: (i, 0)),
        ),
        compiler_params=pltpu.CompilerParams(
            dimension_semantics=("parallel",),
            vmem_limit_bytes=vmem_limit,
        ),
        cost_estimate=cost,
    )(x, w_t, b2)


def init_params(key, input_dim, out_dim=OUT_DIM):
    # Deterministic init mirroring nn.Linear defaults (kaiming-uniform-ish).
    kw, kb = jax.random.split(key)
    bound = 1.0 / jnp.sqrt(jnp.float32(input_dim))
    weight = jax.random.uniform(kw, (out_dim, input_dim), jnp.float32,
                                minval=-bound, maxval=bound)
    bias = jax.random.uniform(kb, (out_dim,), jnp.float32,
                              minval=-bound, maxval=bound)
    return weight, bias


if __name__ == "__main__":
    key = jax.random.PRNGKey(0)
    k_x, k_x2, k_p = jax.random.split(key, 3)

    D = 32
    weight, bias = init_params(k_p, D, OUT_DIM)
    w_t, b2 = prepare_params(weight, bias)        # hoisted once, not per call

    # --- case 1: tiny batch -> XLA fast path ---
    N1 = 8
    x1 = jax.random.normal(k_x, (N1, D), jnp.float32)
    out1 = jax.block_until_ready(clase_clasificacion_forward(x1, w_t, b2))
    ref1 = x1 @ weight.T + bias
    assert out1.shape == (N1, OUT_DIM)
    assert jnp.max(jnp.abs(out1 - ref1)) < 1e-5

    # --- case 2: same tiny batch forced through the Pallas kernel (1 step) ---
    out1p = jax.block_until_ready(
        clase_clasificacion_forward(x1, w_t, b2, force_pallas=True))
    assert out1p.shape == (N1, OUT_DIM)
    assert jnp.max(jnp.abs(out1p - ref1)) < 1e-5

    # --- case 3: multi-step grid with ragged last tile (N % tm != 0) ---
    N2 = 1000
    x2 = jax.random.normal(k_x2, (N2, D), jnp.float32)
    out2 = jax.block_until_ready(
        clase_clasificacion_forward(x2, w_t, b2, tm=256, force_pallas=True))
    ref2 = x2 @ weight.T + bias
    assert out2.shape == (N2, OUT_DIM)
    assert jnp.max(jnp.abs(out2 - ref2)) < 1e-4

    # --- case 4: bf16 activations + bf16 weight (halves the dominant stream) ---
    w_t_bf, b2_bf = prepare_params(weight, bias, compute_dtype=jnp.bfloat16)
    x2_bf = x2.astype(jnp.bfloat16)
    out2_bf = jax.block_until_ready(
        clase_clasificacion_forward(x2_bf, w_t_bf, b2_bf, force_pallas=True))
    assert out2_bf.shape == (N2, OUT_DIM)
    assert jnp.max(jnp.abs(out2_bf.astype(jnp.float32) - ref2)) < 0.25

    print("KERNEL_OK")
</pallas_src>

<mosaic_0001>
module attributes {stable_mosaic.version = 11 : i64} {
  func.func @_linear_kernel(%arg0: i32, %arg1: memref<8x32xf32, #tpu.memory_space<vmem>>, %arg2: memref<32x5xf32, #tpu.memory_space<vmem>>, %arg3: memref<1x5xf32, #tpu.memory_space<vmem>>, %arg4: memref<8x5xf32, #tpu.memory_space<vmem>>) attributes {dimension_semantics = [#tpu.dimension_semantics<parallel>], iteration_bounds = array<i64: 1>, scalar_prefetch = 0 : i64, scratch_operands = 0 : i64, tpu.core_type = #tpu.core_type<tc>, window_params = [{transform_indices = @transform_0, window_bounds = array<i64: 8, 32>}, {pipeline_mode = #tpu.pipeline_mode<synchronous>, transform_indices = @transform_1, window_bounds = array<i64: 32, 5>}, {pipeline_mode = #tpu.pipeline_mode<synchronous>, transform_indices = @transform_2, window_bounds = array<i64: 1, 5>}, {transform_indices = @transform_3, window_bounds = array<i64: 8, 5>}]} {
    %c0 = arith.constant 0 : index
    %c0_0 = arith.constant 0 : index
    %0 = vector.load %arg1[%c0, %c0_0] : memref<8x32xf32, #tpu.memory_space<vmem>>, vector<8x32xf32>
    %c0_1 = arith.constant 0 : index
    %c0_2 = arith.constant 0 : index
    %1 = vector.load %arg2[%c0_1, %c0_2] : memref<32x5xf32, #tpu.memory_space<vmem>>, vector<32x5xf32>
    %cst = arith.constant dense<0.000000e+00> : vector<8x5xf32>
    %2 = tpu.matmul %0, %1, %cst {dimension_numbers = #tpu.dot_dimension_numbers<[1], [0], [0], [1], [0, 0, 1, 1], [], []>} : vector<8x32xf32>, vector<32x5xf32>, vector<8x5xf32> -> vector<8x5xf32>
    %c0_3 = arith.constant 0 : index
    %c0_4 = arith.constant 0 : index
    %3 = vector.load %arg3[%c0_3, %c0_4] : memref<1x5xf32, #tpu.memory_space<vmem>>, vector<1x5xf32>
    %4 = vector.broadcast %3 : vector<1x5xf32> to vector<8x5xf32>
    %5 = arith.addf %2, %4 : vector<8x5xf32>
    %c0_5 = arith.constant 0 : index
    %c0_6 = arith.constant 0 : index
    %6 = vector.load %arg4[%c0_5, %c0_6] : memref<8x5xf32, #tpu.memory_space<vmem>>, vector<8x5xf32>
    tpu.vector_store %arg4[%c0_5, %c0_6], %5 {strides = array<i32>} : memref<8x5xf32, #tpu.memory_space<vmem>>, vector<8x5xf32>,
    return
  }
  func.func @transform_0(%arg0: i32) -> (i32, i32) {
    %c0_i32 = arith.constant 0 : i32
    %c0_i32_0 = arith.constant 0 : i32
    return %arg0, %c0_i32 : i32, i32
  }
  func.func @transform_1(%arg0: i32) -> (i32, i32) {
    %c0_i32 = arith.constant 0 : i32
    %c0_i32_0 = arith.constant 0 : i32
    %c0_i32_1 = arith.constant 0 : i32
    return %c0_i32, %c0_i32_0 : i32, i32
  }
  func.func @transform_2(%arg0: i32) -> (i32, i32) {
    %c0_i32 = arith.constant 0 : i32
    %c0_i32_0 = arith.constant 0 : i32
    %c0_i32_1 = arith.constant 0 : i32
    return %c0_i32, %c0_i32_0 : i32, i32
  }
  func.func @transform_3(%arg0: i32) -> (i32, i32) {
    %c0_i32 = arith.constant 0 : i32
    %c0_i32_0 = arith.constant 0 : i32
    return %arg0, %c0_i32 : i32, i32
  }
}

</mosaic_0001>

<llo_original>
// kernel: tpu_custom_call.1
$region0: #{tpu_custom_call.1}
  #allocation0 [shape = 'u32[]', space=smem, size = 0x4, offset = 0x4, fixed_abs, tag = 'smem constant byte address 0x4 - core index']
  #allocation1 [shape = 'u32[144,128]{1,0:T(1,128)}', space=vmem, size = 0x12000, scoped, tag = 'internal scratch']
  %s0 = inlined_call_operand.vmem [shape: f32[8,32], index: 0, kind: input, shape index: {}]
  %s1 = inlined_call_operand.vmem [shape: f32[32,5], index: 1, kind: input, shape index: {}]
  %s2 = inlined_call_operand.vmem [shape: f32[1,5], index: 2, kind: input, shape index: {}]
  %s3 = inlined_call_operand.hbm [shape: f32[8,5], index: 3, kind: output, shape index: {}]
  %s4 = sld [smem:[#allocation0]]
  $region22: #{tpu_custom_call.1} parent=0
    _
  %s6 = ssub.s32 1, %s4
  %s7 = scalar_select 0, %s6, %s4
  $region1: #{tpu_custom_call.1} parent=0
    #allocation2 [shape = 'u8[4096]{0}', space=vmem, size = 0x1000, scoped, tag = 'output window, operand 0, single buffered']
    #allocation3 [shape = 's32[1]{0}', space=sflag, size = 0x4, scoped, tag = 'scoped memory for tpu_custom_call.1']
    %8 = vsyncpa [#allocation3], 0
    // Predicated region
    $region2: #{tpu_custom_call.1} parent=1 // pred_check
      _
    $region3: #{tpu_custom_call.1} parent=1 // pred_check_branch
      %10 = sbr.rel (0) target = $region5
    $region4: #{tpu_custom_call.1} parent=1 // pred_region
      _
    $region5: #{tpu_custom_call.1} parent=1 // pred_fallthru
      _
    // Predicated region
    $region6: #{tpu_custom_call.1} parent=1 // pred_check
      _
    $region7: #{tpu_custom_call.1} parent=1 // pred_check_branch
      %12 = sbr.rel (0) target = $region9
    $region8: #{tpu_custom_call.1} parent=1 // pred_region
      _
    $region9: #{tpu_custom_call.1} parent=1 // pred_fallthru
      _
    // Predicated region
    $region10: #{tpu_custom_call.1} parent=1 // pred_check
      _
    $region11: #{tpu_custom_call.1} parent=1 // pred_check_branch
      %14 = sbr.rel (0) target = $region13
    $region12: #{tpu_custom_call.1} parent=1 // pred_region
      _
    $region13: #{tpu_custom_call.1} parent=1 // pred_fallthru
      _
    %v15 = vld [vmem:[%s0] sm:$0xff]
    %v16 = vld [vmem:[%s1] sm:$0xff]
    %v17 = vld [vmem:[%s1 + $0x8] sm:$0xff]
    %v18 = vld [vmem:[%s1 + $0x10] sm:$0xff]
    %v19 = vld [vmem:[%s1 + $0x18] sm:$0xff]
    %v20 = vld [vmem:[%s2] sm:$0x1]
    %v22 = vlaneseq
    %v23 = vshrl.u32 %v22, 7
    %v24 = vsub.s32 0, %v23
    %v25 = vrot.slane %v20, %v24
    %vm27 = vcmask 261120
    %v29 = vsel %vm27, %v15, 0
    %31 = vmatprep.subr.mxu0 0.0
    %32 = vmatpush1.msra.mxu0 %v16
    %33 = vmatprep.subr.mxu0 0.0
    %34 = vmatpush1.msra.mxu0 %v17
    %35 = vmatprep.subr.mxu0 0.0
    %36 = vmatpush1.msra.mxu0 %v18
    %37 = vmatprep.subr.mxu0 0.0
    %38 = vmatpush1.msra.mxu0 %v19
    %39 = vmatprep.subr.mxu0 0.0
    %40 = vmatpush1.msra.mxu0 0.0
    %41 = vmatprep.subr.mxu0 0.0
    %42 = vmatpush1.msra.mxu0 0.0
    %43 = vmatprep.subr.mxu0 0.0
    %44 = vmatpush1.msra.mxu0 0.0
    %45 = vmatprep.subr.mxu0 0.0
    %46 = vmatpush1.msra.mxu0 0.0
    %47 = vmatprep.subr.mxu0 0.0
    %48 = vmatpush1.msra.mxu0 0.0
    %49 = vmatprep.subr.mxu0 0.0
    %50 = vmatpush1.msra.mxu0 0.0
    %51 = vmatprep.subr.mxu0 0.0
    %52 = vmatpush1.msra.mxu0 0.0
    %53 = vmatprep.subr.mxu0 0.0
    %54 = vmatpush1.msra.mxu0 0.0
    %55 = vmatprep.subr.mxu0 0.0
    %56 = vmatpush1.msra.mxu0 0.0
    %57 = vmatprep.subr.mxu0 0.0
    %58 = vmatpush1.msra.mxu0 0.0
    %59 = vmatprep.subr.mxu0 0.0
    %60 = vmatpush1.msra.mxu0 0.0
    %61 = vmatprep.subr.mxu0 0.0
    %62 = vmatpush1.msra.mxu0 0.0
    %63 = vmatprep.subr.mxu0 0.0
    %64 = vmatpush1.msra.mxu0 0.0
    %65 = vmatprep.subr.mxu0 0.0
    %66 = vmatpush1.msra.mxu0 0.0
    %67 = vmatprep.subr.mxu0 0.0
    %68 = vmatpush1.msra.mxu0 0.0
    %69 = vmatprep.subr.mxu0 0.0
    %70 = vmatpush1.msra.mxu0 0.0
    %71 = vmatprep.subr.mxu0 0.0
    %72 = vmatpush1.msra.mxu0 0.0
    %73 = vmatprep.subr.mxu0 0.0
    %74 = vmatpush1.msra.mxu0 0.0
    %75 = vmatprep.subr.mxu0 0.0
    %76 = vmatpush1.msra.mxu0 0.0
    %77 = vmatprep.subr.mxu0 0.0
    %78 = vmatpush1.msra.mxu0 0.0
    %79 = vmatprep.subr.mxu0 0.0
    %80 = vmatpush1.msra.mxu0 0.0
    %81 = vmatprep.subr.mxu0 0.0
    %82 = vmatpush1.msra.mxu0 0.0
    %83 = vmatprep.subr.mxu0 0.0
    %84 = vmatpush1.msra.mxu0 0.0
    %85 = vmatprep.subr.mxu0 0.0
    %86 = vmatpush1.msra.mxu0 0.0
    %87 = vmatprep.subr.mxu0 0.0
    %88 = vmatpush1.msra.mxu0 0.0
    %89 = vmatprep.subr.mxu0 0.0
    %90 = vmatpush1.msra.mxu0 0.0
    %91 = vmatprep.subr.mxu0 0.0
    %92 = vmatpush1.msra.mxu0 0.0
    %93 = vmatprep.subr.mxu0 0.0
    %94 = vmatpush1.msra.mxu0 0.0
    %95 = vmatprep.mubr.f32.mxu0 0.0
    %96 = vmatmul.mubr.f32.gmra.mrb[0].mxu0 %v29
    %v97 = vpop.f32.mrb[0].mxu0
    %v98 = vadd.f32 %v25, %v97
    %v99 = vpop.f32.mrb[0].mxu0
    %100 = vdwg.mxu0
    %vm101 = vcmask 39936
    %102 = vst.msk [vmem:[#allocation2] sm:$0xff] %vm101, %v98
    // Predicated region
    $region14: #{tpu_custom_call.1} parent=1 // pred_check
      _
    $region15: #{tpu_custom_call.1} parent=1 // pred_check_branch
      %104 = sbr.rel (0) target = $region17
    $region16: #{tpu_custom_call.1} parent=1 // pred_region
      %s106 = ssub.s32 128, 128
      %107 = vsyncadd [#allocation3], %s106
      %s109 = sshll.u32 [#allocation2], 4
      %s110 = int_to_ptr.vmem [resolvable:$true] %s109
      %112 = dma.vmem_to_hbm [thread:$0]  %s110, 128, %s3, [#allocation3]
    $region17: #{tpu_custom_call.1} parent=1 // pred_fallthru
      _
    // Predicated region
    $region18: #{tpu_custom_call.1} parent=1 // pred_check
      _
    $region19: #{tpu_custom_call.1} parent=1 // pred_check_branch
      %114 = sbr.rel (0) target = $region21
    $region20: #{tpu_custom_call.1} parent=1 // pred_region
      %115 = dma.done [#allocation3], 128
    $region21: #{tpu_custom_call.1} parent=1 // pred_fallthru
      _
    %116 = vsyncpa [#allocation3], 1

</llo_original>
